<compile_context>
chip_gen: v7x
topology: tpu7x:2x2x1
jax: 0.10.0
libtpu: 0.0.40
codegen_flags: <defaults>
</compile_context>

<pallas_src>
import functools

import jax
import jax.numpy as jnp
from jax.experimental import pallas as pl
from jax.experimental.pallas import tpu as pltpu

LANE = 128
SUBL = 8
MAX_TILE_ROWS_32 = 4096        # (4096, 128) f32 block = 2 MiB per input
LOG2 = 0.6931471805599453
VMEM_LIMIT_BYTES = 32 * 1024 * 1024   # fits v5e/v6e (128 MiB) and v7x (64 MiB)


def _num_tensorcores():
    """Best-effort TensorCore-per-chip detection (v7x has 2, v5e/v6e have 1)."""
    try:
        kind = jax.devices()[0].device_kind.lower()
    except Exception:  # pragma: no cover
        return 1
    return 2 if "v7" in kind else 1


def _logcosh_kernel(pred_ref, targ_ref, out_ref, *, tile_rows, tiles_per_split,
                    total_tiles, valid_rows_last, mask_last):
    s = pl.program_id(0)       # split axis ("parallel": maps to TCs on v7x)
    j = pl.program_id(1)       # reduction axis ("arbitrary", innermost)

    @pl.when(j == 0)
    def _():
        out_ref[...] = jnp.zeros_like(out_ref)

    def tile_partial_sum(apply_row_mask):
        # Cast in-kernel so bf16/f16 inputs are read from HBM at native width.
        p = pred_ref[...].astype(jnp.float32)
        t = targ_ref[...].astype(jnp.float32)
        d = (p - t) + jnp.float32(1e-12)
        # Stable log(cosh(d)) = |d| + log(1 + exp(-2|d|)) - log(2)
        a = jnp.abs(d)
        val = a + jnp.log(jnp.float32(1.0) + jnp.exp(-2.0 * a)) - jnp.float32(LOG2)
        if apply_row_mask:
            # Only whole rows can be invalid (wrapper guarantees 128-aligned
            # prefix); tile-local indices -> no int32 overflow for huge n.
            row = jax.lax.broadcasted_iota(jnp.int32, (tile_rows, LANE), 0)
            val = jnp.where(row < valid_rows_last, val, jnp.float32(0.0))
        # Fold the tile to an (8,128) partial sum with pure VALU adds.
        return jnp.sum(val.reshape(tile_rows // SUBL, SUBL, LANE), axis=0)

    if mask_last:
        tile_idx = s * tiles_per_split + j
        is_last = tile_idx == (total_tiles - 1)

        @pl.when(is_last)
        def _():
            out_ref[...] += tile_partial_sum(True)

        @pl.when(tile_idx != (total_tiles - 1))
        def _():
            out_ref[...] += tile_partial_sum(False)
    else:
        out_ref[...] += tile_partial_sum(False)


def log_cosh_loss(y_pred, y_true):
    assert y_pred.shape == y_true.shape, "shapes must match"
    n = y_pred.size
    p = y_pred.reshape(-1)
    t = y_true.reshape(-1)

    # Packing-aware sublane multiple and byte-matched max tile rows.
    itemsize = jnp.dtype(y_pred.dtype).itemsize
    pack = max(1, 4 // max(1, itemsize))        # 1 for f32, 2 for bf16, 4 for 8-bit
    sub_mult = SUBL * pack
    max_rows = MAX_TILE_ROWS_32 * pack

    n_main = (n // LANE) * LANE                 # 128-aligned prefix for the kernel
    total = jnp.float32(0.0)

    if n_main:
        rows = n_main // LANE
        if n_main == n:
            p2 = p.reshape(rows, LANE)
            t2 = t.reshape(rows, LANE)
        else:
            p2 = p[:n_main].reshape(rows, LANE)
            t2 = t[:n_main].reshape(rows, LANE)

        tile_rows = min(max_rows, ((rows + sub_mult - 1) // sub_mult) * sub_mult)
        total_tiles = pl.cdiv(rows, tile_rows)
        valid_rows_last = rows - (total_tiles - 1) * tile_rows
        mask_last = valid_rows_last < tile_rows

        # Split across 2 TensorCores only on multi-TC chips (v7x) and only when
        # the tile count divides evenly (no clamped OOB tile, balanced load).
        num_splits = 1
        if _num_tensorcores() >= 2 and total_tiles >= 2 and total_tiles % 2 == 0:
            num_splits = 2
        tiles_per_split = total_tiles // num_splits

        kernel = functools.partial(
            _logcosh_kernel,
            tile_rows=tile_rows,
            tiles_per_split=tiles_per_split,
            total_tiles=total_tiles,
            valid_rows_last=valid_rows_last,
            mask_last=mask_last,
        )

        # TODO(synk): on v7x, optionally sweep pipeline_mode=pl.Buffered(3) on
        # the two input BlockSpecs if xprof shows exposed DMA between steps.
        out = pl.pallas_call(
            kernel,
            out_shape=jax.ShapeDtypeStruct((num_splits * SUBL, LANE), jnp.float32),
            grid_spec=pltpu.PrefetchScalarGridSpec(
                num_scalar_prefetch=0,
                grid=(num_splits, tiles_per_split),
                in_specs=[
                    pl.BlockSpec((tile_rows, LANE),
                                 lambda s, j: (s * tiles_per_split + j, 0)),
                    pl.BlockSpec((tile_rows, LANE),
                                 lambda s, j: (s * tiles_per_split + j, 0)),
                ],
                out_specs=pl.BlockSpec((SUBL, LANE), lambda s, j: (s, 0)),
            ),
            compiler_params=pltpu.CompilerParams(
                dimension_semantics=("parallel", "arbitrary"),
                vmem_limit_bytes=VMEM_LIMIT_BYTES,
            ),
        )(p2, t2)
        total = total + jnp.sum(out)

    # Fold the <=127-element ragged tail (if any) with plain jnp — avoids a
    # full-array pad/copy of both inputs for sizes not divisible by 128.
    tail = n - n_main
    if tail:
        dp = (p[n_main:].astype(jnp.float32)
              - t[n_main:].astype(jnp.float32)) + jnp.float32(1e-12)
        a = jnp.abs(dp)
        total = total + jnp.sum(
            a + jnp.log(jnp.float32(1.0) + jnp.exp(-2.0 * a)) - jnp.float32(LOG2))

    return total * jnp.float32(1.0 / n)


if __name__ == "__main__":
    key = jax.random.PRNGKey(0)
    k1, k2 = jax.random.split(key)
    shape = (2, 4, 16, 16)  # NCHW-like small example
    y_pred = jax.random.normal(k1, shape, dtype=jnp.float32)
    y_true = jax.random.normal(k2, shape, dtype=jnp.float32)

    loss = log_cosh_loss(y_pred, y_true)
    jax.block_until_ready(loss)

    # reference check in plain JAX
    ref = jnp.mean(jnp.log(jnp.cosh((y_pred - y_true) + 1e-12)))
    assert jnp.allclose(loss, ref, atol=1e-5, rtol=1e-5), (loss, ref)

    print("KERNEL_OK")
</pallas_src>

<mosaic_0001>
module attributes {stable_mosaic.version = 11 : i64} {
  func.func @_logcosh_kernel(%arg0: i32, %arg1: i32, %arg2: memref<16x128xf32, #tpu.memory_space<vmem>>, %arg3: memref<16x128xf32, #tpu.memory_space<vmem>>, %arg4: memref<8x128xf32, #tpu.memory_space<vmem>>) attributes {dimension_semantics = [#tpu.dimension_semantics<parallel>, #tpu.dimension_semantics<arbitrary>], iteration_bounds = array<i64: 1, 1>, scalar_prefetch = 0 : i64, scratch_operands = 0 : i64, tpu.core_type = #tpu.core_type<tc>, window_params = [{transform_indices = @transform_0, window_bounds = array<i64: 16, 128>}, {transform_indices = @transform_1, window_bounds = array<i64: 16, 128>}, {transform_indices = @transform_2, window_bounds = array<i64: 8, 128>}]} {
    %c0_i32 = arith.constant 0 : i32
    %0 = arith.cmpi eq, %arg1, %c0_i32 : i32
    %1 = arith.extui %0 : i1 to i32
    %c0_i32_0 = arith.constant 0 : i32
    %2 = arith.cmpi ne, %1, %c0_i32_0 : i32
    scf.if %2 {
      %cst_12 = arith.constant 0.000000e+00 : f32
      %23 = vector.broadcast %cst_12 : f32 to vector<8x128xf32>
      %c0_13 = arith.constant 0 : index
      %c0_14 = arith.constant 0 : index
      %24 = vector.load %arg4[%c0_13, %c0_14] : memref<8x128xf32, #tpu.memory_space<vmem>>, vector<8x128xf32>
      tpu.vector_store %arg4[%c0_13, %c0_14], %23 {strides = array<i32>} : memref<8x128xf32, #tpu.memory_space<vmem>>, vector<8x128xf32>,
    } else {
    }
    %c0 = arith.constant 0 : index
    %c0_1 = arith.constant 0 : index
    %3 = vector.load %arg4[%c0, %c0_1] : memref<8x128xf32, #tpu.memory_space<vmem>>, vector<8x128xf32>
    %c0_2 = arith.constant 0 : index
    %c0_3 = arith.constant 0 : index
    %4 = vector.load %arg2[%c0_2, %c0_3] : memref<16x128xf32, #tpu.memory_space<vmem>>, vector<16x128xf32>
    %c0_4 = arith.constant 0 : index
    %c0_5 = arith.constant 0 : index
    %5 = vector.load %arg3[%c0_4, %c0_5] : memref<16x128xf32, #tpu.memory_space<vmem>>, vector<16x128xf32>
    %6 = arith.subf %4, %5 : vector<16x128xf32>
    %cst = arith.constant 9.99999996E-13 : f32
    %7 = vector.broadcast %cst : f32 to vector<16x128xf32>
    %8 = arith.addf %6, %7 : vector<16x128xf32>
    %9 = math.absf %8 : vector<16x128xf32>
    %cst_6 = arith.constant -2.000000e+00 : f32
    %10 = vector.broadcast %cst_6 : f32 to vector<16x128xf32>
    %11 = arith.mulf %10, %9 : vector<16x128xf32>
    %12 = math.exp %11 : vector<16x128xf32>
    %cst_7 = arith.constant 1.000000e+00 : f32
    %13 = vector.broadcast %cst_7 : f32 to vector<16x128xf32>
    %14 = arith.addf %13, %12 : vector<16x128xf32>
    %15 = math.log %14 : vector<16x128xf32>
    %16 = arith.addf %9, %15 : vector<16x128xf32>
    %cst_8 = arith.constant 0.693147182 : f32
    %17 = vector.broadcast %cst_8 : f32 to vector<16x128xf32>
    %18 = arith.subf %16, %17 : vector<16x128xf32>
    %19 = vector.shape_cast %18 : vector<16x128xf32> to vector<2x8x128xf32>
    %cst_9 = arith.constant dense<0.000000e+00> : vector<8x128xf32>
    %20 = vector.multi_reduction <add>, %19, %cst_9 [0] : vector<2x8x128xf32> to vector<8x128xf32>
    %21 = arith.addf %3, %20 : vector<8x128xf32>
    %c0_10 = arith.constant 0 : index
    %c0_11 = arith.constant 0 : index
    %22 = vector.load %arg4[%c0_10, %c0_11] : memref<8x128xf32, #tpu.memory_space<vmem>>, vector<8x128xf32>
    tpu.vector_store %arg4[%c0_10, %c0_11], %21 {strides = array<i32>} : memref<8x128xf32, #tpu.memory_space<vmem>>, vector<8x128xf32>,
    return
  }
  func.func @transform_0(%arg0: i32, %arg1: i32) -> (i32, i32) {
    %c1_i32 = arith.constant 1 : i32
    %0 = arith.muli %arg0, %c1_i32 : i32
    %1 = arith.addi %0, %arg1 : i32
    %c0_i32 = arith.constant 0 : i32
    %c0_i32_0 = arith.constant 0 : i32
    return %1, %c0_i32 : i32, i32
  }
  func.func @transform_1(%arg0: i32, %arg1: i32) -> (i32, i32) {
    %c1_i32 = arith.constant 1 : i32
    %0 = arith.muli %arg0, %c1_i32 : i32
    %1 = arith.addi %0, %arg1 : i32
    %c0_i32 = arith.constant 0 : i32
    %c0_i32_0 = arith.constant 0 : i32
    return %1, %c0_i32 : i32, i32
  }
  func.func @transform_2(%arg0: i32, %arg1: i32) -> (i32, i32) {
    %c0_i32 = arith.constant 0 : i32
    %c0_i32_0 = arith.constant 0 : i32
    return %arg0, %c0_i32 : i32, i32
  }
}

</mosaic_0001>

<llo_original>
// kernel: tpu_custom_call.1
$region0: #{tpu_custom_call.1}
  #allocation0 [shape = 'u32[]', space=smem, size = 0x4, offset = 0x4, fixed_abs, tag = 'smem constant byte address 0x4 - core index']
  #allocation1 [shape = 'u32[144,128]{1,0:T(1,128)}', space=vmem, size = 0x12000, scoped, tag = 'internal scratch']
  %s0 = inlined_call_operand.hbm [shape: f32[16,128], index: 0, kind: input, shape index: {}]
  %s1 = inlined_call_operand.hbm [shape: f32[16,128], index: 1, kind: input, shape index: {}]
  %s2 = inlined_call_operand.hbm [shape: f32[8,128], index: 2, kind: output, shape index: {}]
  %s3 = sld [smem:[#allocation0]]
  $region30: #{tpu_custom_call.1} parent=0
    _
  %s5 = ssub.s32 1, %s3
  %s6 = scalar_select 0, %s5, %s3
  $region1: #{tpu_custom_call.1} parent=0
    #allocation2 [shape = 'u8[8192]{0}', space=vmem, size = 0x2000, scoped, tag = 'input window, operand 0, single buffered']
    #allocation3 [shape = 's32[1]{0}', space=sflag, size = 0x4, scoped, tag = 'scoped memory for tpu_custom_call.1']
    #allocation4 [shape = 's32[1]{0}', space=sflag, size = 0x4, scoped, tag = 'scoped memory for tpu_custom_call.1']
    #allocation5 [shape = 'u8[8192]{0}', space=vmem, size = 0x2000, scoped, tag = 'input window, operand 1, single buffered']
    #allocation6 [shape = 's32[1]{0}', space=sflag, size = 0x4, scoped, tag = 'scoped memory for tpu_custom_call.1']
    #allocation7 [shape = 'u8[4096]{0}', space=vmem, size = 0x1000, scoped, tag = 'output window, operand 0, single buffered']
    %7 = vsyncpa [#allocation3], 0
    %8 = vsyncpa [#allocation6], 0
    %9 = vsyncpa [#allocation4], 0
    // Predicated region
    $region2: #{tpu_custom_call.1} parent=1 // pred_check
      _
    $region3: #{tpu_custom_call.1} parent=1 // pred_check_branch
      %11 = sbr.rel (0) target = $region5
    $region4: #{tpu_custom_call.1} parent=1 // pred_region
      %s12 = sadd.s32 0, 0
      %s13 = smul.u32 2, %s12
      %s15 = ssub.s32 256, 256
      %16 = vsyncadd [#allocation3], %s15
      %s17 = smul.addr %s13, 128
      %s18 = scalar_lea.hbm %s0, %s17
      %s19 = sshll.u32 [#allocation2], 4
      %s20 = int_to_ptr.vmem [resolvable:$true] %s19
      %25 = dma.hbm_to_vmem [thread:$0]  %s18, 256, %s20, [#allocation3], 128, 128, 8
    $region5: #{tpu_custom_call.1} parent=1 // pred_fallthru
      _
    // Predicated region
    $region6: #{tpu_custom_call.1} parent=1 // pred_check
      _
    $region7: #{tpu_custom_call.1} parent=1 // pred_check_branch
      %27 = sbr.rel (0) target = $region9
    $region8: #{tpu_custom_call.1} parent=1 // pred_region
      %s28 = sadd.s32 0, 0
      %s29 = smul.u32 2, %s28
      %s31 = ssub.s32 256, 256
      %32 = vsyncadd [#allocation6], %s31
      %s33 = smul.addr %s29, 128
      %s34 = scalar_lea.hbm %s1, %s33
      %s35 = sshll.u32 [#allocation5], 4
      %s36 = int_to_ptr.vmem [resolvable:$true] %s35
      %41 = dma.hbm_to_vmem [thread:$0]  %s34, 256, %s36, [#allocation6], 128, 128, 8
    $region9: #{tpu_custom_call.1} parent=1 // pred_fallthru
      _
    // Predicated region
    $region10: #{tpu_custom_call.1} parent=1 // pred_check
      _
    $region11: #{tpu_custom_call.1} parent=1 // pred_check_branch
      %43 = sbr.rel (0) target = $region13
    $region12: #{tpu_custom_call.1} parent=1 // pred_region
      %44 = dma.done [#allocation3], 256
    $region13: #{tpu_custom_call.1} parent=1 // pred_fallthru
      _
    // Predicated region
    $region14: #{tpu_custom_call.1} parent=1 // pred_check
      _
    $region15: #{tpu_custom_call.1} parent=1 // pred_check_branch
      %46 = sbr.rel (0) target = $region17
    $region16: #{tpu_custom_call.1} parent=1 // pred_region
      %47 = dma.done [#allocation6], 256
    $region17: #{tpu_custom_call.1} parent=1 // pred_fallthru
      _
    %s48 = sadd.s32 0, 0
    %s49 = smul.u32 2, %s48
    %s50 = sadd.s32 0, 0
    %s51 = smul.u32 2, %s50
    %p52 = scmp.eq.s32.totalorder 0, 0
    // Predicated region
    $region18: #{tpu_custom_call.1} parent=1 // pred_check
      %p53 = pneg %p52
    $region19: #{tpu_custom_call.1} parent=1 // pred_check_branch
      %55 = sbr.rel (%p53) target = $region21
    $region20: #{tpu_custom_call.1} parent=1 // pred_region
      %56 = vst [vmem:[#allocation7] sm:$0xff] 0.0
    $region21: #{tpu_custom_call.1} parent=1 // pred_fallthru
      _
    %v57 = vld [vmem:[#allocation7] sm:$0xff]
    %v58 = vld [vmem:[#allocation2] sm:$0xff]
    %v59 = vld [vmem:[#allocation2 + $0x8] sm:$0xff]
    %v60 = vld [vmem:[#allocation5] sm:$0xff]
    %v61 = vld [vmem:[#allocation5 + $0x8] sm:$0xff]
    %v62 = vsub.f32 %v58, %v60
    %v63 = vsub.f32 %v59, %v61
    %v64 = vadd.f32 %v62, 1e-12
    %v65 = vadd.f32 %v63, 1e-12
    %v66 = vand.u32 2147483647, %v64
    %v67 = vand.u32 2147483647, %v65
    %v68 = vmul.f32 %v66, -2.0
    %v69 = vmul.f32 %v67, -2.0
    %v70 = vmul.f32 %v68, 1.442695
    %v71 = vpow.pop %v70
    %v72 = vmul.f32 %v69, 1.442695
    %v73 = vpow.pop %v72
    %v74 = vadd.f32 %v71, 1.0
    %v75 = vadd.f32 %v73, 1.0
    %v76 = vlog2.pop %v74
    %v77 = vmul.f32 %v76, 0.6931472
    %v78 = vlog2.pop %v75
    %v79 = vmul.f32 %v78, 0.6931472
    %v80 = vadd.f32 %v66, %v77
    %v81 = vadd.f32 %v67, %v79
    %v82 = vsub.f32 %v80, 0.6931472
    %v83 = vsub.f32 %v81, 0.6931472
    %v84 = vadd.f32 %v82, %v83
    %v85 = vadd.f32 %v57, %v84
    %86 = vst [vmem:[#allocation7] sm:$0xff] %v85
    // Predicated region
    $region22: #{tpu_custom_call.1} parent=1 // pred_check
      _
    $region23: #{tpu_custom_call.1} parent=1 // pred_check_branch
      %88 = sbr.rel (0) target = $region25
    $region24: #{tpu_custom_call.1} parent=1 // pred_region
      %s90 = ssub.s32 128, 128
      %91 = vsyncadd [#allocation4], %s90
      %s93 = sshll.u32 [#allocation7], 4
      %s94 = int_to_ptr.vmem [resolvable:$true] %s93
      %96 = dma.vmem_to_hbm [thread:$0]  %s94, 128, %s2, [#allocation4]
    $region25: #{tpu_custom_call.1} parent=1 // pred_fallthru
      _
    // Predicated region
    $region26: #{tpu_custom_call.1} parent=1 // pred_check
      _
    $region27: #{tpu_custom_call.1} parent=1 // pred_check_branch
      %98 = sbr.rel (0) target = $region29
    $region28: #{tpu_custom_call.1} parent=1 // pred_region
      %99 = dma.done [#allocation4], 128
    $region29: #{tpu_custom_call.1} parent=1 // pred_fallthru
      _
    %100 = vsyncpa [#allocation3], 1
    %101 = vsyncpa [#allocation6], 1
    %102 = vsyncpa [#allocation4], 1

</llo_original>
